<compile_context>
chip_gen: v5e
topology: v5e:2x2
jax: 0.10.0
libtpu: 0.0.40
codegen_flags: <defaults>
</compile_context>

<pallas_src>
import math

import jax
import jax.numpy as jnp
from jax.experimental import pallas as pl
from jax.experimental.pallas import tpu as pltpu


def _round_up(x, m):
    return ((x + m - 1) // m) * m


def _dense_monotone_kernel(x_ref, w_ref, b_ref, o_ref, acc_ref):
    k = pl.program_id(2)

    @pl.when(k == 0)
    def _():
        acc_ref[...] = jnp.zeros_like(acc_ref)

    # Hot loop: VPU abs (free under MXU) + MXU matmul into f32 accumulator.
    acc_ref[...] += jnp.dot(
        x_ref[...], jnp.abs(w_ref[...]), preferred_element_type=jnp.float32
    )

    @pl.when(k == pl.num_programs(2) - 1)
    def _():
        # Bias added exactly once, in the finalize branch (K is tiled).
        o_ref[...] = (acc_ref[...] + b_ref[...]).astype(o_ref.dtype)


# Below this many flops the per-grid-step (~0.35 us) + custom-call overhead dominates;
# plain XLA is faster.
_TINY_FLOPS_THRESHOLD = 1 << 21


def dense_monotone(inputs, weight, bias=None, *, tm=256, tn=256, tk=256,
                   force_pallas=False):
    """y = inputs @ |weight| (+ bias).

    inputs: (..., in_features); weight: (in_features, out_features); bias: (out_features,) or None.
    """
    in_features, out_features = weight.shape
    orig_shape = inputs.shape
    assert orig_shape[-1] == in_features

    param_dtype = weight.dtype
    x2d = inputs.reshape(-1, in_features).astype(param_dtype)
    M = x2d.shape[0]

    # Tiny-problem bypass: let XLA handle it.
    if not force_pallas and 2 * M * in_features * out_features < _TINY_FLOPS_THRESHOLD:
        y = x2d @ jnp.abs(weight)
        if bias is not None:
            y = y + bias.astype(param_dtype)
        return y.reshape(*orig_shape[:-1], out_features)

    # Shrink tiles for small dims while keeping lane (128) / sublane (16, bf16) alignment.
    tm = min(tm, _round_up(M, 16))
    tk = min(tk, _round_up(in_features, 128))
    tn = min(tn, _round_up(out_features, 128))

    m_pad = _round_up(M, tm)
    k_pad = _round_up(in_features, tk)
    n_pad = _round_up(out_features, tn)

    # bf16 MXU inputs, zero padding (abs(0) == 0, so padded K/N contribute nothing).
    x_p = jnp.zeros((m_pad, k_pad), jnp.bfloat16)
    x_p = x_p.at[:M, :in_features].set(x2d.astype(jnp.bfloat16))
    w_p = jnp.zeros((k_pad, n_pad), jnp.bfloat16)
    w_p = w_p.at[:in_features, :out_features].set(weight.astype(jnp.bfloat16))
    b_p = jnp.zeros((1, n_pad), jnp.float32)
    if bias is not None:
        b_p = b_p.at[0, :out_features].set(bias.astype(jnp.float32))

    grid = (m_pad // tm, n_pad // tn, k_pad // tk)
    out_itemsize = jnp.dtype(param_dtype).itemsize

    cost = pl.CostEstimate(
        flops=2 * m_pad * n_pad * k_pad,
        transcendentals=0,
        bytes_accessed=(
            x_p.size * 2 * grid[1]          # x re-read per N tile
            + w_p.size * 2 * grid[0]        # w re-read per M tile
            + b_p.size * 4
            + m_pad * n_pad * out_itemsize  # output written once
        ),
    )

    out = pl.pallas_call(
        _dense_monotone_kernel,
        out_shape=jax.ShapeDtypeStruct((m_pad, n_pad), param_dtype),
        grid_spec=pltpu.PrefetchScalarGridSpec(
            num_scalar_prefetch=0,
            grid=grid,
            in_specs=[
                pl.BlockSpec((tm, tk), lambda i, j, k: (i, k)),
                pl.BlockSpec((tk, tn), lambda i, j, k: (k, j)),
                pl.BlockSpec((1, tn), lambda i, j, k: (0, j)),
            ],
            out_specs=pl.BlockSpec((tm, tn), lambda i, j, k: (i, j)),
            scratch_shapes=[pltpu.VMEM((tm, tn), jnp.float32)],
        ),
        compiler_params=pltpu.CompilerParams(
            dimension_semantics=("parallel", "parallel", "arbitrary"),
        ),
        cost_estimate=cost,
    )(x_p, w_p, b_p)

    out = out[:M, :out_features]
    return out.reshape(*orig_shape[:-1], out_features)


def init_dense_monotone_params(key, in_features, out_features, dtype=jnp.float32):
    """Mirror the PyTorch defaults.

    torch.nn.init.kaiming_uniform_(a=sqrt(5)) on a (in_features, out_features) tensor:
    torch's _calculate_fan_in_and_fan_out gives fan_in = size(dim=1) = out_features for
    this layout; bias is uniform in [-1/sqrt(fan_in), 1/sqrt(fan_in)].
    """
    k_w, k_b = jax.random.split(key)
    fan_in = out_features  # torch fan_in for an (in, out)-shaped 2-D tensor
    gain = math.sqrt(2.0 / (1.0 + 5.0))
    bound_w = gain * math.sqrt(3.0 / fan_in)
    weight = jax.random.uniform(
        k_w, (in_features, out_features), dtype=dtype, minval=-bound_w, maxval=bound_w
    )
    bound_b = 1.0 / math.sqrt(fan_in) if fan_in > 0 else 0.0
    bias = jax.random.uniform(
        k_b, (out_features,), dtype=dtype, minval=-bound_b, maxval=bound_b
    )
    return weight, bias


if __name__ == "__main__":
    key = jax.random.PRNGKey(0)
    k_params, k_x, k_tiny = jax.random.split(key, 3)

    # Small-but-tiled demo: K spans 2 reduction steps after 256-aligned padding.
    batch_dims = (2, 12)          # flattened to M = 24 rows (padded to 32 sublanes)
    in_features = 320
    out_features = 200

    weight, bias = init_dense_monotone_params(k_params, in_features, out_features)
    x = jax.random.normal(k_x, (*batch_dims, in_features), dtype=jnp.float32)

    # Run the Pallas kernel path explicitly (force past the tiny-problem bypass).
    y = dense_monotone(x, weight, bias, force_pallas=True)
    y = jax.block_until_ready(y)
    assert y.shape == (*batch_dims, out_features)

    # Reference with the same bf16 input quantization, f32 accumulation (tight check).
    x_q = x.astype(jnp.bfloat16).astype(jnp.float32)
    w_q = jnp.abs(weight.astype(jnp.bfloat16)).astype(jnp.float32)
    y_ref_q = jnp.einsum("bmi,io->bmo", x_q, w_q) + bias
    assert jnp.allclose(y, y_ref_q, atol=2e-3, rtol=2e-3), "mismatch vs bf16-quantized reference"

    # Loose sanity check against the full-f32 reference (bf16 input rounding only).
    y_ref = jnp.einsum("bmi,io->bmo", x, jnp.abs(weight)) + bias
    assert jnp.allclose(y, y_ref, atol=5e-2, rtol=5e-2), "mismatch vs f32 reference"

    # Tiny-problem bypass path (plain XLA) stays semantically identical.
    w_s, b_s = init_dense_monotone_params(k_params, 16, 8)
    x_s = jax.random.normal(k_tiny, (4, 16), dtype=jnp.float32)
    y_s = jax.block_until_ready(dense_monotone(x_s, w_s, b_s))
    assert jnp.allclose(y_s, x_s @ jnp.abs(w_s) + b_s, atol=1e-5, rtol=1e-5)

    print("KERNEL_OK")
</pallas_src>

<mosaic_0001>
module attributes {stable_mosaic.version = 11 : i64} {
  func.func @_dense_monotone_kernel(%arg0: i32, %arg1: i32, %arg2: i32, %arg3: memref<32x256xbf16, #tpu.memory_space<vmem>>, %arg4: memref<256x256xbf16, #tpu.memory_space<vmem>>, %arg5: memref<1x256xf32, #tpu.memory_space<vmem>>, %arg6: memref<32x256xf32, #tpu.memory_space<vmem>>, %arg7: memref<32x256xf32, #tpu.memory_space<vmem>>) attributes {dimension_semantics = [#tpu.dimension_semantics<parallel>, #tpu.dimension_semantics<parallel>, #tpu.dimension_semantics<arbitrary>], iteration_bounds = array<i64: 1, 1, 2>, scalar_prefetch = 0 : i64, scratch_operands = 1 : i64, tpu.core_type = #tpu.core_type<tc>, window_params = [{transform_indices = @transform_0, window_bounds = array<i64: 32, 256>}, {transform_indices = @transform_1, window_bounds = array<i64: 256, 256>}, {transform_indices = @transform_2, window_bounds = array<i64: 1, 256>}, {transform_indices = @transform_3, window_bounds = array<i64: 32, 256>}]} {
    %c0_i32 = arith.constant 0 : i32
    %0 = arith.cmpi eq, %arg2, %c0_i32 : i32
    %1 = arith.extui %0 : i1 to i32
    %c0_i32_0 = arith.constant 0 : i32
    %2 = arith.cmpi ne, %1, %c0_i32_0 : i32
    scf.if %2 {
      %cst_9 = arith.constant 0.000000e+00 : f32
      %13 = vector.broadcast %cst_9 : f32 to vector<32x256xf32>
      %c0_10 = arith.constant 0 : index
      %c0_11 = arith.constant 0 : index
      %14 = vector.load %arg7[%c0_10, %c0_11] : memref<32x256xf32, #tpu.memory_space<vmem>>, vector<32x256xf32>
      tpu.vector_store %arg7[%c0_10, %c0_11], %13 {strides = array<i32>} : memref<32x256xf32, #tpu.memory_space<vmem>>, vector<32x256xf32>,
    } else {
    }
    %c0 = arith.constant 0 : index
    %c0_1 = arith.constant 0 : index
    %3 = vector.load %arg7[%c0, %c0_1] : memref<32x256xf32, #tpu.memory_space<vmem>>, vector<32x256xf32>
    %c0_2 = arith.constant 0 : index
    %c0_3 = arith.constant 0 : index
    %4 = vector.load %arg3[%c0_2, %c0_3] : memref<32x256xbf16, #tpu.memory_space<vmem>>, vector<32x256xbf16>
    %c0_4 = arith.constant 0 : index
    %c0_5 = arith.constant 0 : index
    %5 = vector.load %arg4[%c0_4, %c0_5] : memref<256x256xbf16, #tpu.memory_space<vmem>>, vector<256x256xbf16>
    %6 = math.absf %5 : vector<256x256xbf16>
    %cst = arith.constant dense<0.000000e+00> : vector<32x256xf32>
    %7 = tpu.matmul %4, %6, %cst {dimension_numbers = #tpu.dot_dimension_numbers<[1], [0], [0], [1], [0, 0, 1, 1], [], []>} : vector<32x256xbf16>, vector<256x256xbf16>, vector<32x256xf32> -> vector<32x256xf32>
    %8 = arith.addf %3, %7 : vector<32x256xf32>
    %c0_6 = arith.constant 0 : index
    %c0_7 = arith.constant 0 : index
    %9 = vector.load %arg7[%c0_6, %c0_7] : memref<32x256xf32, #tpu.memory_space<vmem>>, vector<32x256xf32>
    tpu.vector_store %arg7[%c0_6, %c0_7], %8 {strides = array<i32>} : memref<32x256xf32, #tpu.memory_space<vmem>>, vector<32x256xf32>,
    %c1_i32 = arith.constant 1 : i32
    %10 = arith.cmpi eq, %arg2, %c1_i32 : i32
    %11 = arith.extui %10 : i1 to i32
    %c0_i32_8 = arith.constant 0 : i32
    %12 = arith.cmpi ne, %11, %c0_i32_8 : i32
    scf.if %12 {
      %c0_9 = arith.constant 0 : index
      %c0_10 = arith.constant 0 : index
      %13 = vector.load %arg7[%c0_9, %c0_10] : memref<32x256xf32, #tpu.memory_space<vmem>>, vector<32x256xf32>
      %c0_11 = arith.constant 0 : index
      %c0_12 = arith.constant 0 : index
      %14 = vector.load %arg5[%c0_11, %c0_12] : memref<1x256xf32, #tpu.memory_space<vmem>>, vector<1x256xf32>
      %15 = vector.broadcast %14 : vector<1x256xf32> to vector<32x256xf32>
      %16 = arith.addf %13, %15 : vector<32x256xf32>
      %c0_13 = arith.constant 0 : index
      %c0_14 = arith.constant 0 : index
      %17 = vector.load %arg6[%c0_13, %c0_14] : memref<32x256xf32, #tpu.memory_space<vmem>>, vector<32x256xf32>
      tpu.vector_store %arg6[%c0_13, %c0_14], %16 {strides = array<i32>} : memref<32x256xf32, #tpu.memory_space<vmem>>, vector<32x256xf32>,
    } else {
    }
    return
  }
  func.func @transform_0(%arg0: i32, %arg1: i32, %arg2: i32) -> (i32, i32) {
    %c0_i32 = arith.constant 0 : i32
    return %arg0, %arg2 : i32, i32
  }
  func.func @transform_1(%arg0: i32, %arg1: i32, %arg2: i32) -> (i32, i32) {
    %c0_i32 = arith.constant 0 : i32
    return %arg2, %arg1 : i32, i32
  }
  func.func @transform_2(%arg0: i32, %arg1: i32, %arg2: i32) -> (i32, i32) {
    %c0_i32 = arith.constant 0 : i32
    %c0_i32_0 = arith.constant 0 : i32
    return %c0_i32, %arg1 : i32, i32
  }
  func.func @transform_3(%arg0: i32, %arg1: i32, %arg2: i32) -> (i32, i32) {
    %c0_i32 = arith.constant 0 : i32
    return %arg0, %arg1 : i32, i32
  }
}

</mosaic_0001>

<llo_original>
// kernel: tpu_custom_call.1
$region0: #{tpu_custom_call.1}
  #allocation0 [shape = 'u32[]', space=smem, size = 0x4, offset = 0x4, fixed_abs, tag = 'smem constant byte address 0x4 - core index']
  #allocation1 [shape = 'u32[72,128]{1,0:T(1,128)}', space=vmem, size = 0x9000, scoped, tag = 'internal scratch']
  #allocation2 [shape = 'f32[32,256]{1,0:T(8,128)}', space=vmem, size = 0x8000, scoped, tag = 'scratch operand']
  %s0 = inlined_call_operand.hbm [shape: bf16[32,512], index: 0, kind: input, shape index: {}]
  %s1 = inlined_call_operand.hbm [shape: bf16[512,256], index: 1, kind: input, shape index: {}]
  %s2 = inlined_call_operand.hbm [shape: f32[1,256], index: 2, kind: input, shape index: {}]
  %s3 = inlined_call_operand.hbm [shape: f32[32,256], index: 3, kind: output, shape index: {}]
  %s4 = sld [smem:[#allocation0]]
  $region65: #{tpu_custom_call.1} parent=0
    _
  %s6 = ssub.s32 1, %s4
  %s7 = scalar_select 0, %s6, %s4
  $region1: #{tpu_custom_call.1} parent=0
    #allocation3 [shape = 'u8[32768]{0}', space=vmem, size = 0x8000, scoped, tag = 'input window, operand 0']
    #allocation4 [shape = 's32[2]{0}', space=sflag, size = 0x8, scoped, tag = 'scoped memory for tpu_custom_call.1']
    #allocation5 [shape = 's32[2]{0}', space=sflag, size = 0x8, scoped, tag = 'scoped memory for tpu_custom_call.1']
    #allocation6 [shape = 'u8[262144]{0}', space=vmem, size = 0x40000, scoped, tag = 'input window, operand 1']
    #allocation7 [shape = 's32[2]{0}', space=sflag, size = 0x8, scoped, tag = 'scoped memory for tpu_custom_call.1']
    #allocation8 [shape = 'u8[1024]{0}', space=vmem, size = 0x400, scoped, tag = 'input window, operand 2, single buffered']
    #allocation9 [shape = 'u8[32768]{0}', space=vmem, size = 0x8000, scoped, tag = 'output window, operand 0, single buffered']
    %8 = vsyncpa [#allocation4], 0
    %s9 = scalar_lea.sflag [#allocation4], 1
    %10 = vsyncpa %s9, 0
    %11 = vsyncpa [#allocation7], 0
    %s12 = scalar_lea.sflag [#allocation7], 1
    %13 = vsyncpa %s12, 0
    %14 = vsyncpa [#allocation5], 0
    loop: start=0, step=1, limit=4
    $region2: #{tpu_custom_call.1} parent=1 // loop_pre_header
      _
    $region3: #{tpu_custom_call.1} parent=1 // loop_header
      %s16 = sphi 0, %s20
      %p17 = scmp.ge.s32.totalorder %s16, 4
      %s23 = sphi 0, %s42
      %s24 = sphi 0, %s38
      %s25 = sphi 0, %s34
      %s26 = sphi 0, %s23
      %s27 = sphi 0, %s24
      %s28 = sphi 0, %s25
      %s29 = sphi 0, %s26
      %s30 = sphi 0, %s27
      %s31 = sphi 0, %s28
      %s47 = sphi 0, %s49
      %s50 = sphi 0, %s47
      %s51 = sphi 0, %s50
      %s67 = sphi 0, %s51
      %s75 = sphi 0, %s77
      %s78 = sphi 0, %s75
      %s79 = sphi 0, %s78
      %s95 = sphi 0, %s79
      %s101 = sphi 0, %s103
      %s104 = sphi 0, %s101
      %s105 = sphi 0, %s104
      %s121 = sphi 0, %s105
      %s129 = sphi 0, %s131
      %s132 = sphi 0, %s129
      %s133 = sphi 0, %s132
      %s149 = sphi 0, %s133
    $region4: #{tpu_custom_call.1} parent=1 // loop_header_branch
      %19 = sbr.rel (%p17) target = $region8
    $region5: #{tpu_custom_call.1} parent=1 // loop_body
      %s21 = ssub.s32 %s16, 1
      %s22 = ssub.s32 %s16, 2
      %s32 = sadd.s32 1, %s25
      %p33 = scmp.ge.s32.totalorder %s32, 2
      %s34 = scalar_select %p33, 0, %s32
      %s35 = sadd.s32 1, %s24
      %s36 = scalar_select %p33, %s35, %s24
      %p37 = scmp.ge.s32.totalorder %s36, 1
      %s38 = scalar_select %p37, 0, %s36
      %s39 = sadd.s32 1, %s23
      %s40 = scalar_select %p37, %s39, %s23
      %p41 = scmp.ge.s32.totalorder %s40, 1
      %s42 = scalar_select %p41, 0, %s40
      %s43 = ssub.s32 %s23, %s42
      %s44 = ssub.s32 %s25, %s34
      %s45 = sor.u32 %s43, %s44
      %p46 = scmp.eq.s32.totalorder %s45, 0
      %s48 = sadd.s32 %s47, 1
      %s49 = scalar_select %p46, %s47, %s48
      %p52 = pneg %p46
      %p53 = scmp.eq.s32.totalorder %s16, 1
      %p54 = por %p52, %p53
      %p55 = scmp.ne.s32.totalorder %s47, %s50
      %p56 = scmp.eq.s32.totalorder %s16, 0
      %p57 = por %p55, %p56
      %p58 = scmp.ne.s32.totalorder %s47, %s50
      %p59 = scmp.eq.s32.totalorder %s21, 1
      %p60 = por %p58, %p59
      %p61 = scmp.ne.s32.totalorder %s50, %s51
      %p62 = scmp.eq.s32.totalorder %s21, 0
      %p63 = por %p61, %p62
      %p64 = scmp.ne.s32.totalorder %s50, %s51
      %p65 = scmp.eq.s32.totalorder %s22, 1
      %p66 = por %p64, %p65
      %p68 = scmp.ne.s32.totalorder %s51, %s67
      %p69 = scmp.eq.s32.totalorder %s22, 0
      %p70 = por %p68, %p69
      %s71 = ssub.s32 %s25, %s34
      %s72 = ssub.s32 %s24, %s38
      %s73 = sor.u32 %s71, %s72
      %p74 = scmp.eq.s32.totalorder %s73, 0
      %s76 = sadd.s32 %s75, 1
      %s77 = scalar_select %p74, %s75, %s76
      %p80 = pneg %p74
      %p81 = scmp.eq.s32.totalorder %s16, 1
      %p82 = por %p80, %p81
      %p83 = scmp.ne.s32.totalorder %s75, %s78
      %p84 = scmp.eq.s32.totalorder %s16, 0
      %p85 = por %p83, %p84
      %p86 = scmp.ne.s32.totalorder %s75, %s78
      %p87 = scmp.eq.s32.totalorder %s21, 1
      %p88 = por %p86, %p87
      %p89 = scmp.ne.s32.totalorder %s78, %s79
      %p90 = scmp.eq.s32.totalorder %s21, 0
      %p91 = por %p89, %p90
      %p92 = scmp.ne.s32.totalorder %s78, %s79
      %p93 = scmp.eq.s32.totalorder %s22, 1
      %p94 = por %p92, %p93
      %p96 = scmp.ne.s32.totalorder %s79, %s95
      %p97 = scmp.eq.s32.totalorder %s22, 0
      %p98 = por %p96, %p97
      %s99 = ssub.s32 %s24, %s38
      %p100 = scmp.eq.s32.totalorder %s99, 0
      %s102 = sadd.s32 %s101, 1
      %s103 = scalar_select %p100, %s101, %s102
      %p106 = pneg %p100
      %p107 = scmp.eq.s32.totalorder %s16, 1
      %p108 = por %p106, %p107
      %p109 = scmp.ne.s32.totalorder %s101, %s104
      %p110 = scmp.eq.s32.totalorder %s16, 0
      %p111 = por %p109, %p110
      %p112 = scmp.ne.s32.totalorder %s101, %s104
      %p113 = scmp.eq.s32.totalorder %s21, 1
      %p114 = por %p112, %p113
      %p115 = scmp.ne.s32.totalorder %s104, %s105
      %p116 = scmp.eq.s32.totalorder %s21, 0
      %p117 = por %p115, %p116
      %p118 = scmp.ne.s32.totalorder %s104, %s105
      %p119 = scmp.eq.s32.totalorder %s22, 1
      %p120 = por %p118, %p119
      %p122 = scmp.ne.s32.totalorder %s105, %s121
      %p123 = scmp.eq.s32.totalorder %s22, 0
      %p124 = por %p122, %p123
      %s125 = ssub.s32 %s23, %s42
      %s126 = ssub.s32 %s24, %s38
      %s127 = sor.u32 %s125, %s126
      %p128 = scmp.eq.s32.totalorder %s127, 0
      %s130 = sadd.s32 %s129, 1
      %s131 = scalar_select %p128, %s129, %s130
      %p134 = pneg %p128
      %p135 = scmp.eq.s32.totalorder %s16, 1
      %p136 = por %p134, %p135
      %p137 = scmp.ne.s32.totalorder %s129, %s132
      %p138 = scmp.eq.s32.totalorder %s16, 0
      %p139 = por %p137, %p138
      %p140 = scmp.ne.s32.totalorder %s129, %s132
      %p141 = scmp.eq.s32.totalorder %s21, 1
      %p142 = por %p140, %p141
      %p143 = scmp.ne.s32.totalorder %s132, %s133
      %p144 = scmp.eq.s32.totalorder %s21, 0
      %p145 = por %p143, %p144
      %p146 = scmp.ne.s32.totalorder %s132, %s133
      %p147 = scmp.eq.s32.totalorder %s22, 1
      %p148 = por %p146, %p147
      %p150 = scmp.ne.s32.totalorder %s133, %s149
      %p151 = scmp.eq.s32.totalorder %s22, 0
      %p152 = por %p150, %p151
      %p153 = scmp.le.s32.totalorder 1, %s16
      %p154 = scmp.lt.s32.totalorder %s16, 3
      %p155 = pnand %p153, %p154
      %p156 = pneg %p155
      // Predicated region
      $region9: #{tpu_custom_call.1} parent=5 // pred_check
        _
      $region10: #{tpu_custom_call.1} parent=5 // pred_check_branch
        %158 = sbr.rel (%p155) target = $region12
      $region11: #{tpu_custom_call.1} parent=5 // pred_region
        %s159 = ssub.s32 %s16, 1
        // Predicated region
        $region13: #{tpu_custom_call.1} parent=11 // pred_check
          %p160 = pneg %p117
        $region14: #{tpu_custom_call.1} parent=11 // pred_check_branch
          %162 = sbr.rel (%p160) target = $region16
        $region15: #{tpu_custom_call.1} parent=11 // pred_region
          %s163 = smul.u32 2, %s27
          %165 = vsyncadd [#allocation7], 0
          %s166 = scalar_lea.hbm %s2, %s163
          %s168 = sshll.u32 %s166, 4
          %s169 = int_to_ptr.hbm [resolvable:$true] %s168
          %s170 = sshll.u32 [#allocation8], 4
          %s171 = int_to_ptr.vmem [resolvable:$true] %s170
          %173 = dma.hbm_to_vmem [thread:$0]  %s169, 32, %s171, [#allocation7]
        $region16: #{tpu_custom_call.1} parent=11 // pred_fallthru
          _
      $region12: #{tpu_custom_call.1} parent=5 // pred_fallthru
        _
      %p174 = scmp.lt.s32.totalorder %s16, 2
      // Predicated region
      $region17: #{tpu_custom_call.1} parent=5 // pred_check
        %p175 = pneg %p174
      $region18: #{tpu_custom_call.1} parent=5 // pred_check_branch
        %177 = sbr.rel (%p175) target = $region20
      $region19: #{tpu_custom_call.1} parent=5 // pred_region
        // Predicated region
        $region21: #{tpu_custom_call.1} parent=19 // pred_check
          %p178 = pneg %p57
        $region22: #{tpu_custom_call.1} parent=19 // pred_check_branch
          %180 = sbr.rel (%p178) target = $region24
        $region23: #{tpu_custom_call.1} parent=19 // pred_region
          %s181 = sand.u32 %s47, 1
          %s182 = scalar_lea.sflag [#allocation4], %s181
          %s183 = sand.u32 %s47, 1
          %s184 = smul.addr %s183, 32
          %s185 = scalar_lea.vmem [#allocation3], %s184
          %s186 = smul.u32 4, %s23
          %s187 = smul.u32 2, %s25
          %189 = vsyncadd %s182, 0
          %s190 = smul.addr %s186, 4
          %s191 = sadd.s32 %s187, %s190
          %s192 = smul.addr %s191, 4
          %s193 = scalar_lea.hbm %s0, %s192
          %s194 = sshll.u32 %s193, 4
          %s195 = int_to_ptr.hbm [resolvable:$true] %s194
          %s196 = sshll.u32 %s185, 4
          %s197 = int_to_ptr.vmem [resolvable:$true] %s196
          %202 = dma.hbm_to_vmem [thread:$0]  %s195, 512, %s197, %s182, 256, 128, 8
        $region24: #{tpu_custom_call.1} parent=19 // pred_fallthru
          _
        // Predicated region
        $region25: #{tpu_custom_call.1} parent=19 // pred_check
          %p203 = pneg %p85
        $region26: #{tpu_custom_call.1} parent=19 // pred_check_branch
          %205 = sbr.rel (%p203) target = $region28
        $region27: #{tpu_custom_call.1} parent=19 // pred_region
          %s206 = sand.u32 %s16, 1
          %s207 = scalar_lea.sflag [#allocation7], %s206
          %s208 = sand.u32 %s75, 1
          %s209 = smul.addr %s208, 256
          %s210 = scalar_lea.vmem [#allocation6], %s209
          %s211 = smul.u32 32, %s25
          %s212 = smul.u32 2, %s24
          %214 = vsyncadd %s207, 0
          %s215 = smul.addr %s211, 2
          %s216 = sadd.s32 %s212, %s215
          %s217 = smul.addr %s216, 4
          %s218 = scalar_lea.hbm %s1, %s217
          %s219 = sshll.u32 %s218, 4
          %s220 = int_to_ptr.hbm [resolvable:$true] %s219
          %s221 = sshll.u32 %s210, 4
          %s222 = int_to_ptr.vmem [resolvable:$true] %s221
          %227 = dma.hbm_to_vmem [thread:$0]  %s220, 4096, %s222, %s207, 128, 128, 8
        $region28: #{tpu_custom_call.1} parent=19 // pred_fallthru
          _
      $region20: #{tpu_custom_call.1} parent=5 // pred_fallthru
        _
      %p228 = scmp.le.s32.totalorder 1, %s16
      %p229 = scmp.lt.s32.totalorder %s16, 3
      %p230 = pnand %p228, %p229
      %p231 = pneg %p230
      // Predicated region
      $region29: #{tpu_custom_call.1} parent=5 // pred_check
        _
      $region30: #{tpu_custom_call.1} parent=5 // pred_check_branch
        %233 = sbr.rel (%p230) target = $region32
      $region31: #{tpu_custom_call.1} parent=5 // pred_region
        %s234 = ssub.s32 %s16, 1
        %s235 = sand.u32 %s50, 1
        %s236 = scalar_lea.sflag [#allocation4], %s235
        %s237 = sand.u32 %s50, 1
        %s238 = smul.addr %s237, 32
        %s239 = scalar_lea.vmem [#allocation3], %s238
        // Predicated region
        $region33: #{tpu_custom_call.1} parent=31 // pred_check
          %p240 = pneg %p63
        $region34: #{tpu_custom_call.1} parent=31 // pred_check_branch
          %242 = sbr.rel (%p240) target = $region36
        $region35: #{tpu_custom_call.1} parent=31 // pred_region
          %244 = dma.done %s236, 512
        $region36: #{tpu_custom_call.1} parent=31 // pred_fallthru
          _
        %s245 = sand.u32 %s21, 1
        %s246 = scalar_lea.sflag [#allocation7], %s245
        %s247 = sand.u32 %s78, 1
        %s248 = smul.addr %s247, 256
        %s249 = scalar_lea.vmem [#allocation6], %s248
        // Predicated region
        $region37: #{tpu_custom_call.1} parent=31 // pred_check
          %p250 = pneg %p91
        $region38: #{tpu_custom_call.1} parent=31 // pred_check_branch
          %252 = sbr.rel (%p250) target = $region40
        $region39: #{tpu_custom_call.1} parent=31 // pred_region
          %254 = dma.done %s246, 4096
        $region40: #{tpu_custom_call.1} parent=31 // pred_fallthru
          _
        // Predicated region
        $region41: #{tpu_custom_call.1} parent=31 // pred_check
          %p255 = pneg %p117
        $region42: #{tpu_custom_call.1} parent=31 // pred_check_branch
          %257 = sbr.rel (%p255) target = $region44
        $region43: #{tpu_custom_call.1} parent=31 // pred_region
          %259 = dma.done [#allocation7], 32
        $region44: #{tpu_custom_call.1} parent=31 // pred_fallthru
          _
        %s260 = sand.u32 %s50, 1
        %s261 = scalar_lea.sflag [#allocation4], %s260
        %s262 = sand.u32 %s50, 1
        %s263 = smul.addr %s262, 32
        %s264 = scalar_lea.vmem [#allocation3], %s263
        %p265 = pneg %p63
        %p266 = pneg %p60
        %s267 = sand.u32 %s21, 1
        %s268 = scalar_lea.sflag [#allocation7], %s267
        %s269 = sand.u32 %s78, 1
        %s270 = smul.addr %s269, 256
        %s271 = scalar_lea.vmem [#allocation6], %s270
        %p272 = pneg %p91
        %p273 = pneg %p88
        %p274 = pneg %p117
        %p275 = pneg %p114
        %p276 = pneg %p145
        %p277 = pneg %p142
        %s278 = smul.u32 4, %s26
        %s279 = smul.u32 2, %s28
        %s280 = smul.u32 32, %s28
        %s281 = smul.u32 2, %s27
        %s282 = smul.u32 2, %s27
        %s283 = smul.u32 4, %s26
        %s284 = smul.u32 2, %s27
        %p285 = scmp.eq.s32.totalorder %s28, 0
        // Predicated region
        $region45: #{tpu_custom_call.1} parent=31 // pred_check
          %p286 = pneg %p285
        $region46: #{tpu_custom_call.1} parent=31 // pred_check_branch
          %288 = sbr.rel (%p286) target = $region48
        $region47: #{tpu_custom_call.1} parent=31 // pred_region
          %289 = vst [vmem:[#allocation2] sm:$0xff] 0.0
          %290 = vst [vmem:[#allocation2 + $0x8] sm:$0xff] 0.0
          %291 = vst [vmem:[#allocation2 + $0x10] sm:$0xff] 0.0
          %292 = vst [vmem:[#allocation2 + $0x18] sm:$0xff] 0.0
          %293 = vst [vmem:[#allocation2 + $0x20] sm:$0xff] 0.0
          %294 = vst [vmem:[#allocation2 + $0x28] sm:$0xff] 0.0
          %295 = vst [vmem:[#allocation2 + $0x30] sm:$0xff] 0.0
          %296 = vst [vmem:[#allocation2 + $0x38] sm:$0xff] 0.0
        $region48: #{tpu_custom_call.1} parent=31 // pred_fallthru
          _
        %v297 = vld [vmem:[#allocation2] sm:$0xff]
        %v298 = vld [vmem:[#allocation2 + $0x8] sm:$0xff]
        %v299 = vld [vmem:[#allocation2 + $0x10] sm:$0xff]
        %v300 = vld [vmem:[#allocation2 + $0x18] sm:$0xff]
        %v301 = vld [vmem:[#allocation2 + $0x20] sm:$0xff]
        %v302 = vld [vmem:[#allocation2 + $0x28] sm:$0xff]
        %v303 = vld [vmem:[#allocation2 + $0x30] sm:$0xff]
        %v304 = vld [vmem:[#allocation2 + $0x38] sm:$0xff]
        %v305 = vld [vmem:[%s239] sm:$0xff]
        %v306 = vld [vmem:[%s239 + $0x8] sm:$0xff]
        %v307 = vld [vmem:[%s239 + $0x10] sm:$0xff]
        %v308 = vld [vmem:[%s239 + $0x18] sm:$0xff]
        %v309 = vld [vmem:[%s249] sm:$0xff]
        %v310 = vld [vmem:[%s249 + $0x8] sm:$0xff]
        %v311 = vld [vmem:[%s249 + $0x10] sm:$0xff]
        %v312 = vld [vmem:[%s249 + $0x18] sm:$0xff]
        %v313 = vld [vmem:[%s249 + $0x20] sm:$0xff]
        %v314 = vld [vmem:[%s249 + $0x28] sm:$0xff]
        %v315 = vld [vmem:[%s249 + $0x30] sm:$0xff]
        %v316 = vld [vmem:[%s249 + $0x38] sm:$0xff]
        %v317 = vld [vmem:[%s249 + $0x40] sm:$0xff]
        %v318 = vld [vmem:[%s249 + $0x48] sm:$0xff]
        %v319 = vld [vmem:[%s249 + $0x50] sm:$0xff]
        %v320 = vld [vmem:[%s249 + $0x58] sm:$0xff]
        %v321 = vld [vmem:[%s249 + $0x60] sm:$0xff]
        %v322 = vld [vmem:[%s249 + $0x68] sm:$0xff]
        %v323 = vld [vmem:[%s249 + $0x70] sm:$0xff]
        %v324 = vld [vmem:[%s249 + $0x78] sm:$0xff]
        %v325 = vld [vmem:[%s249 + $0x80] sm:$0xff]
        %v326 = vld [vmem:[%s249 + $0x88] sm:$0xff]
        %v327 = vld [vmem:[%s249 + $0x90] sm:$0xff]
        %v328 = vld [vmem:[%s249 + $0x98] sm:$0xff]
        %v329 = vld [vmem:[%s249 + $0xa0] sm:$0xff]
        %v330 = vld [vmem:[%s249 + $0xa8] sm:$0xff]
        %v331 = vld [vmem:[%s249 + $0xb0] sm:$0xff]
        %v332 = vld [vmem:[%s249 + $0xb8] sm:$0xff]
        %v333 = vld [vmem:[%s249 + $0xc0] sm:$0xff]
        %v334 = vld [vmem:[%s249 + $0xc8] sm:$0xff]
        %v335 = vld [vmem:[%s249 + $0xd0] sm:$0xff]
        %v336 = vld [vmem:[%s249 + $0xd8] sm:$0xff]
        %v337 = vld [vmem:[%s249 + $0xe0] sm:$0xff]
        %v338 = vld [vmem:[%s249 + $0xe8] sm:$0xff]
        %v339 = vld [vmem:[%s249 + $0xf0] sm:$0xff]
        %v340 = vld [vmem:[%s249 + $0xf8] sm:$0xff]
        %v341 = vand.u32 2147450879, %v309
        %v342 = vand.u32 2147450879, %v310
        %v343 = vand.u32 2147450879, %v311
        %v344 = vand.u32 2147450879, %v312
        %v345 = vand.u32 2147450879, %v313
        %v346 = vand.u32 2147450879, %v314
        %v347 = vand.u32 2147450879, %v315
        %v348 = vand.u32 2147450879, %v316
        %v349 = vand.u32 2147450879, %v317
        %v350 = vand.u32 2147450879, %v318
        %v351 = vand.u32 2147450879, %v319
        %v352 = vand.u32 2147450879, %v320
        %v353 = vand.u32 2147450879, %v321
        %v354 = vand.u32 2147450879, %v322
        %v355 = vand.u32 2147450879, %v323
        %v356 = vand.u32 2147450879, %v324
        %v357 = vand.u32 2147450879, %v325
        %v358 = vand.u32 2147450879, %v326
        %v359 = vand.u32 2147450879, %v327
        %v360 = vand.u32 2147450879, %v328
        %v361 = vand.u32 2147450879, %v329
        %v362 = vand.u32 2147450879, %v330
        %v363 = vand.u32 2147450879, %v331
        %v364 = vand.u32 2147450879, %v332
        %v365 = vand.u32 2147450879, %v333
        %v366 = vand.u32 2147450879, %v334
        %v367 = vand.u32 2147450879, %v335
        %v368 = vand.u32 2147450879, %v336
        %v369 = vand.u32 2147450879, %v337
        %v370 = vand.u32 2147450879, %v338
        %v371 = vand.u32 2147450879, %v339
        %v372 = vand.u32 2147450879, %v340
        %v377 = vunpack.c.l.b16 %v305
        %v378 = vunpack.c.h.b16 %v305
        %v379 = vunpack.c.l.b16 %v306
        %v380 = vunpack.c.h.b16 %v306
        %v381 = vunpack.c.l.b16 %v307
        %v382 = vunpack.c.h.b16 %v307
        %v383 = vunpack.c.l.b16 %v308
        %v384 = vunpack.c.h.b16 %v308
        %v385 = vpack.c.b16 %v379, %v377
        %v386 = vpack.c.b16 %v380, %v378
        %v387 = vpack.c.b16 %v383, %v381
        %v388 = vpack.c.b16 %v384, %v382
        %v425 = vunpack.c.l.b16 %v341
        %v426 = vunpack.c.h.b16 %v341
        %v427 = vunpack.c.l.b16 %v342
        %v428 = vunpack.c.h.b16 %v342
        %v429 = vunpack.c.l.b16 %v343
        %v430 = vunpack.c.h.b16 %v343
        %v431 = vunpack.c.l.b16 %v344
        %v432 = vunpack.c.h.b16 %v344
        %v433 = vunpack.c.l.b16 %v345
        %v434 = vunpack.c.h.b16 %v345
        %v435 = vunpack.c.l.b16 %v346
        %v436 = vunpack.c.h.b16 %v346
        %v437 = vunpack.c.l.b16 %v347
        %v438 = vunpack.c.h.b16 %v347
        %v439 = vunpack.c.l.b16 %v348
        %v440 = vunpack.c.h.b16 %v348
        %v441 = vunpack.c.l.b16 %v349
        %v442 = vunpack.c.h.b16 %v349
        %v443 = vunpack.c.l.b16 %v350
        %v444 = vunpack.c.h.b16 %v350
        %v445 = vunpack.c.l.b16 %v351
        %v446 = vunpack.c.h.b16 %v351
        %v447 = vunpack.c.l.b16 %v352
        %v448 = vunpack.c.h.b16 %v352
        %v449 = vunpack.c.l.b16 %v353
        %v450 = vunpack.c.h.b16 %v353
        %v451 = vunpack.c.l.b16 %v354
        %v452 = vunpack.c.h.b16 %v354
        %v453 = vunpack.c.l.b16 %v355
        %v454 = vunpack.c.h.b16 %v355
        %v455 = vunpack.c.l.b16 %v356
        %v456 = vunpack.c.h.b16 %v356
        %v457 = vunpack.c.l.b16 %v357
        %v458 = vunpack.c.h.b16 %v357
        %v459 = vunpack.c.l.b16 %v358
        %v460 = vunpack.c.h.b16 %v358
        %v461 = vunpack.c.l.b16 %v359
        %v462 = vunpack.c.h.b16 %v359
        %v463 = vunpack.c.l.b16 %v360
        %v464 = vunpack.c.h.b16 %v360
        %v465 = vunpack.c.l.b16 %v361
        %v466 = vunpack.c.h.b16 %v361
        %v467 = vunpack.c.l.b16 %v362
        %v468 = vunpack.c.h.b16 %v362
        %v469 = vunpack.c.l.b16 %v363
        %v470 = vunpack.c.h.b16 %v363
        %v471 = vunpack.c.l.b16 %v364
        %v472 = vunpack.c.h.b16 %v364
        %v473 = vunpack.c.l.b16 %v365
        %v474 = vunpack.c.h.b16 %v365
        %v475 = vunpack.c.l.b16 %v366
        %v476 = vunpack.c.h.b16 %v366
        %v477 = vunpack.c.l.b16 %v367
        %v478 = vunpack.c.h.b16 %v367
        %v479 = vunpack.c.l.b16 %v368
        %v480 = vunpack.c.h.b16 %v368
        %v481 = vunpack.c.l.b16 %v369
        %v482 = vunpack.c.h.b16 %v369
        %v483 = vunpack.c.l.b16 %v370
        %v484 = vunpack.c.h.b16 %v370
        %v485 = vunpack.c.l.b16 %v371
        %v486 = vunpack.c.h.b16 %v371
        %v487 = vunpack.c.l.b16 %v372
        %v488 = vunpack.c.h.b16 %v372
        %v489 = vpack.c.b16 %v427, %v425
        %v490 = vpack.c.b16 %v428, %v426
        %v491 = vpack.c.b16 %v431, %v429
        %v492 = vpack.c.b16 %v432, %v430
        %v493 = vpack.c.b16 %v435, %v433
        %v494 = vpack.c.b16 %v436, %v434
        %v495 = vpack.c.b16 %v439, %v437
        %v496 = vpack.c.b16 %v440, %v438
        %v497 = vpack.c.b16 %v443, %v441
        %v498 = vpack.c.b16 %v444, %v442
        %v499 = vpack.c.b16 %v447, %v445
        %v500 = vpack.c.b16 %v448, %v446
        %v501 = vpack.c.b16 %v451, %v449
        %v502 = vpack.c.b16 %v452, %v450
        %v503 = vpack.c.b16 %v455, %v453
        %v504 = vpack.c.b16 %v456, %v454
        %v505 = vpack.c.b16 %v459, %v457
        %v506 = vpack.c.b16 %v460, %v458
        %v507 = vpack.c.b16 %v463, %v461
        %v508 = vpack.c.b16 %v464, %v462
        %v509 = vpack.c.b16 %v467, %v465
        %v510 = vpack.c.b16 %v468, %v466
        %v511 = vpack.c.b16 %v471, %v469
        %v512 = vpack.c.b16 %v472, %v470
        %v513 = vpack.c.b16 %v475, %v473
        %v514 = vpack.c.b16 %v476, %v474
        %v515 = vpack.c.b16 %v479, %v477
        %v516 = vpack.c.b16 %v480, %v478
        %v517 = vpack.c.b16 %v483, %v481
        %v518 = vpack.c.b16 %v484, %v482
        %v519 = vpack.c.b16 %v487, %v485
        %v520 = vpack.c.b16 %v488, %v486
        %553 = vmatpush.bf16.msra.mxu0 %v503
        %554 = vmatpush.bf16.msra.mxu0 %v501
        %555 = vmatpush.bf16.msra.mxu0 %v499
        %556 = vmatpush.bf16.msra.mxu0 %v497
        %557 = vmatpush.bf16.msra.mxu0 %v495
        %558 = vmatpush.bf16.msra.mxu0 %v493
        %559 = vmatpush.bf16.msra.mxu0 %v491
        %560 = vmatpush.bf16.msra.mxu0 %v489
        %561 = vmatmul.bf16.gmra.mxu0 %v385
        %v562 = vpop.f32.mrf.mxu0
        %v563 = vadd.f32 0.0, %v562
        %v564 = vpop.f32.mrf.mxu0
        %v565 = vadd.f32 0.0, %v564
        %566 = vmatmul.bf16.gmra.mxu0 %v387
        %v567 = vpop.f32.mrf.mxu0
        %v568 = vadd.f32 0.0, %v567
        %v569 = vpop.f32.mrf.mxu0
        %v570 = vadd.f32 0.0, %v569
        %571 = vdwg.mxu0
        %572 = vmatpush.bf16.msra.mxu0 %v519
        %573 = vmatpush.bf16.msra.mxu0 %v517
        %574 = vmatpush.bf16.msra.mxu0 %v515
        %575 = vmatpush.bf16.msra.mxu0 %v513
        %576 = vmatpush.bf16.msra.mxu0 %v511
        %577 = vmatpush.bf16.msra.mxu0 %v509
        %578 = vmatpush.bf16.msra.mxu0 %v507
        %579 = vmatpush.bf16.msra.mxu0 %v505
        %580 = vmatmul.bf16.gmra.mxu0 %v386
        %v581 = vpop.f32.mrf.mxu0
        %v582 = vadd.f32 %v563, %v581
        %v583 = vpop.f32.mrf.mxu0
        %v584 = vadd.f32 %v565, %v583
        %585 = vmatmul.bf16.gmra.mxu0 %v388
        %v586 = vpop.f32.mrf.mxu0
        %v587 = vadd.f32 %v568, %v586
        %v588 = vpop.f32.mrf.mxu0
        %v589 = vadd.f32 %v570, %v588
        %590 = vdwg.mxu0
        %591 = vmatpush.bf16.msra.mxu0 %v504
        %592 = vmatpush.bf16.msra.mxu0 %v502
        %593 = vmatpush.bf16.msra.mxu0 %v500
        %594 = vmatpush.bf16.msra.mxu0 %v498
        %595 = vmatpush.bf16.msra.mxu0 %v496
        %596 = vmatpush.bf16.msra.mxu0 %v494
        %597 = vmatpush.bf16.msra.mxu0 %v492
        %598 = vmatpush.bf16.msra.mxu0 %v490
        %599 = vmatmul.bf16.gmra.mxu0 %v385
        %v600 = vpop.f32.mrf.mxu0
        %v601 = vadd.f32 0.0, %v600
        %v602 = vpop.f32.mrf.mxu0
        %v603 = vadd.f32 0.0, %v602
        %604 = vmatmul.bf16.gmra.mxu0 %v387
        %v605 = vpop.f32.mrf.mxu0
        %v606 = vadd.f32 0.0, %v605
        %v607 = vpop.f32.mrf.mxu0
        %v608 = vadd.f32 0.0, %v607
        %609 = vdwg.mxu0
        %610 = vmatpush.bf16.msra.mxu0 %v520
        %611 = vmatpush.bf16.msra.mxu0 %v518
        %612 = vmatpush.bf16.msra.mxu0 %v516
        %613 = vmatpush.bf16.msra.mxu0 %v514
        %614 = vmatpush.bf16.msra.mxu0 %v512
        %615 = vmatpush.bf16.msra.mxu0 %v510
        %616 = vmatpush.bf16.msra.mxu0 %v508
        %617 = vmatpush.bf16.msra.mxu0 %v506
        %618 = vmatmul.bf16.gmra.mxu0 %v386
        %v619 = vpop.f32.mrf.mxu0
        %v620 = vadd.f32 %v601, %v619
        %v621 = vpop.f32.mrf.mxu0
        %v622 = vadd.f32 %v603, %v621
        %623 = vmatmul.bf16.gmra.mxu0 %v388
        %v624 = vpop.f32.mrf.mxu0
        %v625 = vadd.f32 %v606, %v624
        %v626 = vpop.f32.mrf.mxu0
        %v627 = vadd.f32 %v608, %v626
        %628 = vdwg.mxu0
        %v629 = vadd.f32 %v297, %v582
        %v630 = vadd.f32 %v298, %v620
        %v631 = vadd.f32 %v299, %v584
        %v632 = vadd.f32 %v300, %v622
        %v633 = vadd.f32 %v301, %v587
        %v634 = vadd.f32 %v302, %v625
        %v635 = vadd.f32 %v303, %v589
        %v636 = vadd.f32 %v304, %v627
        %637 = vst [vmem:[#allocation2] sm:$0xff] %v629
        %638 = vst [vmem:[#allocation2 + $0x8] sm:$0xff] %v630
        %639 = vst [vmem:[#allocation2 + $0x10] sm:$0xff] %v631
        %640 = vst [vmem:[#allocation2 + $0x18] sm:$0xff] %v632
        %641 = vst [vmem:[#allocation2 + $0x20] sm:$0xff] %v633
        %642 = vst [vmem:[#allocation2 + $0x28] sm:$0xff] %v634
        %643 = vst [vmem:[#allocation2 + $0x30] sm:$0xff] %v635
        %644 = vst [vmem:[#allocation2 + $0x38] sm:$0xff] %v636
        %p645 = scmp.eq.s32.totalorder %s28, 1
        // Predicated region
        $region49: #{tpu_custom_call.1} parent=31 // pred_check
          %p646 = pneg %p645
        $region50: #{tpu_custom_call.1} parent=31 // pred_check_branch
          %648 = sbr.rel (%p646) target = $region52
        $region51: #{tpu_custom_call.1} parent=31 // pred_region
          %v649 = vld [vmem:[#allocation2] sm:$0xff]
          %v650 = vld [vmem:[#allocation2 + $0x8] sm:$0xff]
          %v651 = vld [vmem:[#allocation2 + $0x10] sm:$0xff]
          %v652 = vld [vmem:[#allocation2 + $0x18] sm:$0xff]
          %v653 = vld [vmem:[#allocation2 + $0x20] sm:$0xff]
          %v654 = vld [vmem:[#allocation2 + $0x28] sm:$0xff]
          %v655 = vld [vmem:[#allocation2 + $0x30] sm:$0xff]
          %v656 = vld [vmem:[#allocation2 + $0x38] sm:$0xff]
          %v657 = vld [vmem:[#allocation8] sm:$0x3]
          %v659 = vperm.slane %v657, 0
          %v660 = vperm.slane %v657, 1
          %v663 = vadd.f32 %v649, %v659
          %v664 = vadd.f32 %v650, %v660
          %v665 = vadd.f32 %v651, %v659
          %v666 = vadd.f32 %v652, %v660
          %v667 = vadd.f32 %v653, %v659
          %v668 = vadd.f32 %v654, %v660
          %v669 = vadd.f32 %v655, %v659
          %v670 = vadd.f32 %v656, %v660
          %671 = vst [vmem:[#allocation9] sm:$0xff] %v663
          %672 = vst [vmem:[#allocation9 + $0x8] sm:$0xff] %v664
          %673 = vst [vmem:[#allocation9 + $0x10] sm:$0xff] %v665
          %674 = vst [vmem:[#allocation9 + $0x18] sm:$0xff] %v666
          %675 = vst [vmem:[#allocation9 + $0x20] sm:$0xff] %v667
          %676 = vst [vmem:[#allocation9 + $0x28] sm:$0xff] %v668
          %677 = vst [vmem:[#allocation9 + $0x30] sm:$0xff] %v669
          %678 = vst [vmem:[#allocation9 + $0x38] sm:$0xff] %v670
        $region52: #{tpu_custom_call.1} parent=31 // pred_fallthru
          _
        // Predicated region
        $region53: #{tpu_custom_call.1} parent=31 // pred_check
          %p679 = pneg %p142
        $region54: #{tpu_custom_call.1} parent=31 // pred_check_branch
          %681 = sbr.rel (%p679) target = $region56
        $region55: #{tpu_custom_call.1} parent=31 // pred_region
          %s682 = smul.u32 4, %s26
          %s683 = smul.u32 2, %s27
          %685 = vsyncadd [#allocation5], 0
          %s686 = smul.addr %s682, 2
          %s687 = sadd.s32 %s683, %s686
          %s688 = smul.addr %s687, 8
          %s689 = scalar_lea.hbm %s3, %s688
          %s690 = sshll.u32 [#allocation9], 4
          %s691 = int_to_ptr.vmem [resolvable:$true] %s690
          %s692 = sshll.u32 %s689, 4
          %s693 = int_to_ptr.hbm [resolvable:$true] %s692
          %698 = dma.vmem_to_hbm [thread:$0]  %s691, 1024, %s693, [#allocation5], 256, 256, 16
        $region56: #{tpu_custom_call.1} parent=31 // pred_fallthru
          _
        // Predicated region
        $region57: #{tpu_custom_call.1} parent=31 // pred_check
          %p699 = pneg %p142
        $region58: #{tpu_custom_call.1} parent=31 // pred_check_branch
          %701 = sbr.rel (%p699) target = $region60
        $region59: #{tpu_custom_call.1} parent=31 // pred_region
          %703 = dma.done [#allocation5], 1024
        $region60: #{tpu_custom_call.1} parent=31 // pred_fallthru
          _
      $region32: #{tpu_custom_call.1} parent=5 // pred_fallthru
        _
      %p704 = scmp.le.s32.totalorder 2, %s16
      // Predicated region
      $region61: #{tpu_custom_call.1} parent=5 // pred_check
        %p705 = pneg %p704
      $region62: #{tpu_custom_call.1} parent=5 // pred_check_branch
        %707 = sbr.rel (%p705) target = $region64
      $region63: #{tpu_custom_call.1} parent=5 // pred_region
        %s708 = ssub.s32 %s16, 2
      $region64: #{tpu_custom_call.1} parent=5 // pred_fallthru
        _
    $region6: #{tpu_custom_call.1} parent=1 // loop_footer
      %s20 = sadd.s32 1, %s16
    $region7: #{tpu_custom_call.1} parent=1 // loop_footer_branch
      %15 = sbr.rel target = $region3
    $region8: #{tpu_custom_call.1} parent=1 // loop_exit
      _
    %709 = vsyncpa [#allocation4], 1
    %s710 = scalar_lea.sflag [#allocation4], 1
    %711 = vsyncpa %s710, 1
    %712 = vsyncpa [#allocation7], 1
    %s713 = scalar_lea.sflag [#allocation7], 1
    %714 = vsyncpa %s713, 1
    %715 = vsyncpa [#allocation5], 1
    %s716 = scalar_lea.sflag [#allocation5], 1
    %717 = vsyncpa %s716, 1

</llo_original>
